<compile_context>
chip_gen: v6e
topology: v6e:2x2x1
jax: 0.10.0
libtpu: 0.0.40
codegen_flags: <defaults>
</compile_context>

<pallas_src>
import functools
import math

import jax
import jax.numpy as jnp
from jax import lax
from jax.experimental import pallas as pl
from jax.experimental.pallas import tpu as pltpu


def _round_up(x, m):
    return ((x + m - 1) // m) * m


def _vmem_capacity_bytes():
    """Physical VMEM of the current generation (conservative fallback)."""
    try:
        info = pltpu.get_tpu_info()
        cap = getattr(info, "vmem_capacity_bytes", None)
        if cap:
            return int(cap)
    except Exception:
        pass
    return 64 * 1024 * 1024  # v7x-sized conservative default


def _gelu_f32(y, approximate):
    if approximate:
        # tanh approximation runs on the EUP (separate VLIW slot).
        return jax.nn.gelu(y, approximate=True)
    inv_sqrt2 = jnp.float32(0.7071067811865476)
    return 0.5 * y * (1.0 + lax.erf(y * inv_sqrt2))


def _linear_gelu_kernel(x_ref, w_ref, b_ref, o_ref, *, approximate):
    """Full-K contraction per tile: o = gelu(x_tile @ w_tile + b_tile)."""
    y = jnp.dot(x_ref[...], w_ref[...], preferred_element_type=jnp.float32)
    y = y + b_ref[...].astype(jnp.float32)
    o_ref[...] = _gelu_f32(y, approximate).astype(o_ref.dtype)


def _linear_gelu_splitk_kernel(x_ref, w_ref, b_ref, o_ref, acc_ref, *,
                               approximate):
    """Split-K fallback: accumulate in f32 VMEM scratch across the K axis."""
    k = pl.program_id(2)

    @pl.when(k == 0)
    def _():
        acc_ref[...] = jnp.zeros_like(acc_ref)

    acc_ref[...] += jnp.dot(x_ref[...], w_ref[...],
                            preferred_element_type=jnp.float32)

    @pl.when(k == pl.num_programs(2) - 1)
    def _():
        y = acc_ref[...] + b_ref[...].astype(jnp.float32)
        o_ref[...] = _gelu_f32(y, approximate).astype(o_ref.dtype)


def prepare_params(weight, bias, compute_dtype=jnp.bfloat16):
    """One-time transform of PyTorch-layout params (hoist out of hot path).

    weight: [out_features, in_features]  ->  w_t: [in_features, out_features]
    """
    w_t = weight.T
    if compute_dtype is not None:
        w_t = w_t.astype(compute_dtype)
    if bias is None:
        bias = jnp.zeros((weight.shape[0],), jnp.float32)
    return w_t, bias.astype(jnp.float32)


def linear_gelu(x2d, w_t, bias, *, tm=256, tn=512,
                compute_dtype=jnp.bfloat16, out_dtype=None,
                approximate=False, vmem_budget_bytes=None):
    """gelu(x2d @ w_t + bias).  x2d: [M, K], w_t: [K, N], bias: [N]."""
    M, K = x2d.shape
    K2, N = w_t.shape
    assert K == K2
    assert bias.shape == (N,)

    out_dtype = out_dtype if out_dtype is not None else x2d.dtype
    if compute_dtype is not None:
        x2d = x2d.astype(compute_dtype)
        w_t = w_t.astype(compute_dtype)      # no-op if prepared via prepare_params
    else:
        w_t = w_t.astype(x2d.dtype)
    bias = bias.astype(jnp.float32)

    in_item = jnp.dtype(x2d.dtype).itemsize
    out_item = jnp.dtype(out_dtype).itemsize
    # Sublane granularity: 8 for 4-byte, 16 for bf16, 32 for int8/fp8.
    sub = max(8, 32 // in_item)

    # Generation-aware VMEM budget / limit.
    cap = _vmem_capacity_bytes()
    if vmem_budget_bytes is None:
        # ~28 MiB on v7x (64 MiB phys, keep headroom), 48 MiB on v5e/v6e.
        vmem_budget_bytes = min(cap * 7 // 16, 48 * 1024 * 1024)

    def _vmem_est(tm_, tn_, tk_=K, acc=False):
        est = (2 * (tm_ * tk_ * in_item + tk_ * tn_ * in_item)   # x, w (dbl-buf)
               + 2 * 8 * tn_ * 4                                 # bias (dbl-buf, padded)
               + 2 * tm_ * tn_ * out_item)                       # output (dbl-buf)
        if acc:
            est += tm_ * tn_ * 4                                 # f32 accumulator
        return est

    # ---- tile sizing -------------------------------------------------------
    M_pad0 = _round_up(M, sub)
    tm = min(tm, M_pad0)
    tm = max(sub, (tm // sub) * sub)
    # Prefer a tm that divides the sublane-rounded M so X needs no padding.
    if M_pad0 % tm != 0:
        c = tm
        while c >= max(sub, tm // 2):
            if M_pad0 % c == 0:
                tm = c
                break
            c -= sub

    N_pad128 = _round_up(N, 128)
    tn = min(tn, N_pad128)
    tn = max(128, (tn // 128) * 128)

    # Full-weight residency: if the whole [K, N] slab fits, stream X once.
    if _vmem_est(tm, N_pad128) <= vmem_budget_bytes:
        tn = N_pad128

    # Shrink tm BEFORE tn (X HBM traffic ~ M*K*N/tn, independent of tm).
    while _vmem_est(tm, tn) > vmem_budget_bytes and tm > sub:
        tm = max(sub, (tm // 2) // sub * sub)
    while _vmem_est(tm, tn) > vmem_budget_bytes and tn > 128:
        tn = max(128, (tn // 2) // 128 * 128)

    use_splitk = _vmem_est(tm, tn) > vmem_budget_bytes
    tk = K
    if use_splitk:
        # Largest K chunk (multiple of 128) that fits; floor at 128.
        tk = max(128, (K // 128) * 128)
        while tk > 128 and _vmem_est(tm, tn, tk, acc=True) > vmem_budget_bytes:
            tk = max(128, (tk // 2) // 128 * 128)

    # ---- padding -----------------------------------------------------------
    M_pad = _round_up(M, tm)
    N_pad = _round_up(N, tn)
    K_pad = _round_up(K, tk) if use_splitk else K
    if M_pad != M or (use_splitk and K_pad != K):
        x2d = jnp.pad(x2d, ((0, M_pad - M), (0, K_pad - K)))
    if N_pad != N or (use_splitk and K_pad != K):
        w_t = jnp.pad(w_t, ((0, K_pad - K), (0, N_pad - N)))
    if N_pad != N:
        bias = jnp.pad(bias, (0, N_pad - N))
    bias2d = bias.reshape(1, N_pad)

    est = _vmem_est(tm, tn, tk, acc=use_splitk)
    vmem_limit = int(min(max(2 * est, 32 * 1024 * 1024),
                         cap - 8 * 1024 * 1024,       # headroom (critical on v7x)
                         112 * 1024 * 1024))

    cost = pl.CostEstimate(
        flops=2 * M * K * N,
        transcendentals=M * N,
        bytes_accessed=int(M_pad * K_pad * in_item * (N_pad // tn)
                           + K_pad * N_pad * in_item
                           + N_pad * 4
                           + M_pad * N_pad * out_item),
    )

    # Grid: N-blocks outermost (j) so each [K, tn] weight slab is fetched once
    # and reused across the whole M sweep (and, on v7x, the core split lands
    # on j so total W HBM reads stay at 1x).
    if not use_splitk:
        grid = (N_pad // tn, M_pad // tm)
        out2d = pl.pallas_call(
            functools.partial(_linear_gelu_kernel, approximate=approximate),
            out_shape=jax.ShapeDtypeStruct((M_pad, N_pad), out_dtype),
            grid_spec=pltpu.PrefetchScalarGridSpec(
                num_scalar_prefetch=0,
                grid=grid,
                in_specs=[
                    pl.BlockSpec((tm, K), lambda j, i: (i, 0)),   # x rows (streamed)
                    pl.BlockSpec((K, tn), lambda j, i: (0, j)),   # weight slab (resident over i)
                    pl.BlockSpec((1, tn), lambda j, i: (0, j)),   # bias slab
                ],
                out_specs=pl.BlockSpec((tm, tn), lambda j, i: (i, j)),
            ),
            compiler_params=pltpu.CompilerParams(
                dimension_semantics=("parallel", "parallel"),
                vmem_limit_bytes=vmem_limit,
            ),
            cost_estimate=cost,
        )(x2d, w_t, bias2d)
    else:
        grid = (N_pad // tn, M_pad // tm, K_pad // tk)
        out2d = pl.pallas_call(
            functools.partial(_linear_gelu_splitk_kernel,
                              approximate=approximate),
            out_shape=jax.ShapeDtypeStruct((M_pad, N_pad), out_dtype),
            grid_spec=pltpu.PrefetchScalarGridSpec(
                num_scalar_prefetch=0,
                grid=grid,
                in_specs=[
                    pl.BlockSpec((tm, tk), lambda j, i, k: (i, k)),
                    pl.BlockSpec((tk, tn), lambda j, i, k: (k, j)),
                    pl.BlockSpec((1, tn), lambda j, i, k: (0, j)),
                ],
                out_specs=pl.BlockSpec((tm, tn), lambda j, i, k: (i, j)),
                scratch_shapes=[pltpu.VMEM((tm, tn), jnp.float32)],
            ),
            compiler_params=pltpu.CompilerParams(
                dimension_semantics=("parallel", "parallel", "arbitrary"),
                vmem_limit_bytes=vmem_limit,
            ),
            cost_estimate=cost,
        )(x2d, w_t, bias2d)

    return out2d[:M, :N]


def linear_activation_prepared(x, w_t, bias, *, compute_dtype=jnp.bfloat16,
                               out_dtype=None, approximate=False,
                               tm=256, tn=512, vmem_budget_bytes=None):
    """Hot-path entry: weights already prepared via prepare_params()."""
    in_features = x.shape[-1]
    out_features = w_t.shape[1]
    x2d = x.reshape(-1, in_features)
    out2d = linear_gelu(x2d, w_t, bias, tm=tm, tn=tn,
                        compute_dtype=compute_dtype, out_dtype=out_dtype,
                        approximate=approximate,
                        vmem_budget_bytes=vmem_budget_bytes)
    return out2d.reshape(*x.shape[:-1], out_features)


def linear_activation(x, weight, bias, *, act="gelu",
                      compute_dtype=jnp.bfloat16, out_dtype=None,
                      approximate=False, tm=256, tn=512,
                      vmem_budget_bytes=None):
    """PyTorch LinearActivation forward: act(x @ weight.T + bias).

    x: [..., in_features]; weight: [out_features, in_features] (PyTorch layout);
    bias: [out_features] or None.
    """
    # TODO(synk): only the 'gelu' entry of ACT2FN is implemented in-kernel.
    assert act == "gelu", "only gelu activation is implemented"
    in_features = x.shape[-1]
    out_features = weight.shape[0]
    assert weight.shape == (out_features, in_features)
    w_t, bias = prepare_params(weight, bias, compute_dtype)
    return linear_activation_prepared(
        x, w_t, bias, compute_dtype=compute_dtype, out_dtype=out_dtype,
        approximate=approximate, tm=tm, tn=tn,
        vmem_budget_bytes=vmem_budget_bytes)


if __name__ == "__main__":
    # Small shapes consistent with the module's use in BERT.
    batch, seq = 2, 8
    in_features = 32
    out_features = 128

    key = jax.random.PRNGKey(0)
    k_x, k_w, k_b, k_x2, k_w2, k_b2 = jax.random.split(key, 6)

    # Deterministic init mirroring kaiming_uniform_(a=sqrt(5)):
    bound = 1.0 / math.sqrt(in_features)
    weight = jax.random.uniform(
        k_w, (out_features, in_features), jnp.float32, -bound, bound)
    bias = jax.random.uniform(
        k_b, (out_features,), jnp.float32, -bound, bound)
    x = jax.random.normal(k_x, (batch, seq, in_features), jnp.float32)

    def ref_fn(x_, w_, b_):
        y = x_ @ w_.T + b_
        return 0.5 * y * (1.0 + lax.erf(y / jnp.sqrt(2.0)))

    ref = ref_fn(x, weight, bias)

    # Default path: bf16 operands, f32 accumulation, pre-prepared weights.
    w_t, b_prep = prepare_params(weight, bias, jnp.bfloat16)
    out = linear_activation_prepared(x, w_t, b_prep)
    out = jax.block_until_ready(out)
    assert out.shape == (batch, seq, out_features)
    assert jnp.allclose(out, ref, atol=5e-2, rtol=5e-2)

    # f32 parity path (exact match with the PyTorch module semantics).
    out_f32 = linear_activation(x, weight, bias, compute_dtype=None)
    out_f32 = jax.block_until_ready(out_f32)
    assert jnp.allclose(out_f32, ref, atol=1e-5, rtol=1e-5)

    # Split-K fallback path (forced via a tiny VMEM budget, larger K).
    in2 = 256
    bound2 = 1.0 / math.sqrt(in2)
    weight2 = jax.random.uniform(
        k_w2, (out_features, in2), jnp.float32, -bound2, bound2)
    bias2 = jax.random.uniform(k_b2, (out_features,), jnp.float32,
                               -bound2, bound2)
    x2 = jax.random.normal(k_x2, (batch, seq, in2), jnp.float32)
    ref2 = ref_fn(x2, weight2, bias2)
    out2 = linear_activation(x2, weight2, bias2, compute_dtype=None,
                             vmem_budget_bytes=200 * 1024)
    out2 = jax.block_until_ready(out2)
    assert jnp.allclose(out2, ref2, atol=2e-4, rtol=1e-4)

    print("KERNEL_OK")
</pallas_src>

<mosaic_0001>
module attributes {stable_mosaic.version = 11 : i64} {
  func.func @_linear_gelu_kernel(%arg0: i32, %arg1: i32, %arg2: memref<16x32xbf16, #tpu.memory_space<vmem>>, %arg3: memref<32x128xbf16, #tpu.memory_space<vmem>>, %arg4: memref<1x128xf32, #tpu.memory_space<vmem>>, %arg5: memref<16x128xf32, #tpu.memory_space<vmem>>) attributes {dimension_semantics = [#tpu.dimension_semantics<parallel>, #tpu.dimension_semantics<parallel>], iteration_bounds = array<i64: 1, 1>, scalar_prefetch = 0 : i64, scratch_operands = 0 : i64, tpu.core_type = #tpu.core_type<tc>, window_params = [{transform_indices = @transform_0, window_bounds = array<i64: 16, 32>}, {transform_indices = @transform_1, window_bounds = array<i64: 32, 128>}, {transform_indices = @transform_2, window_bounds = array<i64: 1, 128>}, {transform_indices = @transform_3, window_bounds = array<i64: 16, 128>}]} {
    %c0 = arith.constant 0 : index
    %c0_0 = arith.constant 0 : index
    %0 = vector.load %arg2[%c0, %c0_0] : memref<16x32xbf16, #tpu.memory_space<vmem>>, vector<16x32xbf16>
    %c0_1 = arith.constant 0 : index
    %c0_2 = arith.constant 0 : index
    %1 = vector.load %arg3[%c0_1, %c0_2] : memref<32x128xbf16, #tpu.memory_space<vmem>>, vector<32x128xbf16>
    %cst = arith.constant dense<0.000000e+00> : vector<16x128xf32>
    %2 = tpu.matmul %0, %1, %cst {dimension_numbers = #tpu.dot_dimension_numbers<[1], [0], [0], [1], [0, 0, 1, 1], [], []>} : vector<16x32xbf16>, vector<32x128xbf16>, vector<16x128xf32> -> vector<16x128xf32>
    %c0_3 = arith.constant 0 : index
    %c0_4 = arith.constant 0 : index
    %3 = vector.load %arg4[%c0_3, %c0_4] : memref<1x128xf32, #tpu.memory_space<vmem>>, vector<1x128xf32>
    %4 = vector.broadcast %3 : vector<1x128xf32> to vector<16x128xf32>
    %5 = arith.addf %2, %4 : vector<16x128xf32>
    %cst_5 = arith.constant 5.000000e-01 : f32
    %6 = vector.broadcast %cst_5 : f32 to vector<16x128xf32>
    %7 = arith.mulf %6, %5 : vector<16x128xf32>
    %cst_6 = arith.constant 0.707106769 : f32
    %8 = vector.broadcast %cst_6 : f32 to vector<16x128xf32>
    %9 = arith.mulf %5, %8 : vector<16x128xf32>
    %10 = math.erf %9 : vector<16x128xf32>
    %cst_7 = arith.constant 1.000000e+00 : f32
    %11 = vector.broadcast %cst_7 : f32 to vector<16x128xf32>
    %12 = arith.addf %11, %10 : vector<16x128xf32>
    %13 = arith.mulf %7, %12 : vector<16x128xf32>
    %c0_8 = arith.constant 0 : index
    %c0_9 = arith.constant 0 : index
    %14 = vector.load %arg5[%c0_8, %c0_9] : memref<16x128xf32, #tpu.memory_space<vmem>>, vector<16x128xf32>
    tpu.vector_store %arg5[%c0_8, %c0_9], %13 {strides = array<i32>} : memref<16x128xf32, #tpu.memory_space<vmem>>, vector<16x128xf32>,
    return
  }
  func.func @transform_0(%arg0: i32, %arg1: i32) -> (i32, i32) {
    %c0_i32 = arith.constant 0 : i32
    %c0_i32_0 = arith.constant 0 : i32
    return %arg1, %c0_i32 : i32, i32
  }
  func.func @transform_1(%arg0: i32, %arg1: i32) -> (i32, i32) {
    %c0_i32 = arith.constant 0 : i32
    %c0_i32_0 = arith.constant 0 : i32
    return %c0_i32, %arg0 : i32, i32
  }
  func.func @transform_2(%arg0: i32, %arg1: i32) -> (i32, i32) {
    %c0_i32 = arith.constant 0 : i32
    %c0_i32_0 = arith.constant 0 : i32
    return %c0_i32, %arg0 : i32, i32
  }
  func.func @transform_3(%arg0: i32, %arg1: i32) -> (i32, i32) {
    %c0_i32 = arith.constant 0 : i32
    return %arg1, %arg0 : i32, i32
  }
}

</mosaic_0001>

<llo_original>
// kernel: tpu_custom_call.1
$region0: #{tpu_custom_call.1}
  #allocation0 [shape = 'u32[]', space=smem, size = 0x4, offset = 0x4, fixed_abs, tag = 'smem constant byte address 0x4 - core index']
  #allocation1 [shape = 'u32[144,128]{1,0:T(1,128)}', space=vmem, size = 0x12000, scoped, tag = 'internal scratch']
  %s0 = inlined_call_operand.hbm [shape: bf16[16,32], index: 0, kind: input, shape index: {}]
  %s1 = inlined_call_operand.hbm [shape: bf16[32,128], index: 1, kind: input, shape index: {}]
  %s2 = inlined_call_operand.vmem [shape: f32[1,128], index: 2, kind: input, shape index: {}]
  %s3 = inlined_call_operand.hbm [shape: f32[16,128], index: 3, kind: output, shape index: {}]
  %s4 = sld [smem:[#allocation0]]
  $region30: #{tpu_custom_call.1} parent=0
    _
  %s6 = ssub.s32 1, %s4
  %s7 = scalar_select 0, %s6, %s4
  $region1: #{tpu_custom_call.1} parent=0
    #allocation2 [shape = 'u8[4096]{0}', space=vmem, size = 0x1000, scoped, tag = 'input window, operand 0, single buffered']
    #allocation3 [shape = 's32[1]{0}', space=sflag, size = 0x4, scoped, tag = 'scoped memory for tpu_custom_call.1']
    #allocation4 [shape = 's32[1]{0}', space=sflag, size = 0x4, scoped, tag = 'scoped memory for tpu_custom_call.1']
    #allocation5 [shape = 'u8[8192]{0}', space=vmem, size = 0x2000, scoped, tag = 'input window, operand 1, single buffered']
    #allocation6 [shape = 's32[1]{0}', space=sflag, size = 0x4, scoped, tag = 'scoped memory for tpu_custom_call.1']
    #allocation7 [shape = 'u8[8192]{0}', space=vmem, size = 0x2000, scoped, tag = 'output window, operand 0, single buffered']
    %8 = vsyncpa [#allocation3], 0
    %9 = vsyncpa [#allocation6], 0
    %10 = vsyncpa [#allocation4], 0
    // Predicated region
    $region2: #{tpu_custom_call.1} parent=1 // pred_check
      _
    $region3: #{tpu_custom_call.1} parent=1 // pred_check_branch
      %12 = sbr.rel (0) target = $region5
    $region4: #{tpu_custom_call.1} parent=1 // pred_region
      %s14 = ssub.s32 128, 128
      %15 = vsyncadd [#allocation3], %s14
      %s16 = sshll.u32 [#allocation2], 4
      %s17 = int_to_ptr.vmem [resolvable:$true] %s16
      %22 = dma.hbm_to_vmem [thread:$0]  %s0, 128, %s17, [#allocation3], 64, 64, 4
    $region5: #{tpu_custom_call.1} parent=1 // pred_fallthru
      _
    // Predicated region
    $region6: #{tpu_custom_call.1} parent=1 // pred_check
      _
    $region7: #{tpu_custom_call.1} parent=1 // pred_check_branch
      %24 = sbr.rel (0) target = $region9
    $region8: #{tpu_custom_call.1} parent=1 // pred_region
      %s26 = ssub.s32 256, 256
      %27 = vsyncadd [#allocation6], %s26
      %s28 = sshll.u32 [#allocation5], 4
      %s29 = int_to_ptr.vmem [resolvable:$true] %s28
      %34 = dma.hbm_to_vmem [thread:$0]  %s1, 256, %s29, [#allocation6], 64, 64, 4
    $region9: #{tpu_custom_call.1} parent=1 // pred_fallthru
      _
    // Predicated region
    $region10: #{tpu_custom_call.1} parent=1 // pred_check
      _
    $region11: #{tpu_custom_call.1} parent=1 // pred_check_branch
      %36 = sbr.rel (0) target = $region13
    $region12: #{tpu_custom_call.1} parent=1 // pred_region
      _
    $region13: #{tpu_custom_call.1} parent=1 // pred_fallthru
      _
    // Predicated region
    $region14: #{tpu_custom_call.1} parent=1 // pred_check
      _
    $region15: #{tpu_custom_call.1} parent=1 // pred_check_branch
      %38 = sbr.rel (0) target = $region17
    $region16: #{tpu_custom_call.1} parent=1 // pred_region
      %39 = dma.done [#allocation3], 128
    $region17: #{tpu_custom_call.1} parent=1 // pred_fallthru
      _
    // Predicated region
    $region18: #{tpu_custom_call.1} parent=1 // pred_check
      _
    $region19: #{tpu_custom_call.1} parent=1 // pred_check_branch
      %41 = sbr.rel (0) target = $region21
    $region20: #{tpu_custom_call.1} parent=1 // pred_region
      %42 = dma.done [#allocation6], 256
    $region21: #{tpu_custom_call.1} parent=1 // pred_fallthru
      _
    %v44 = vld [vmem:[#allocation2] sm:$0xf]
    %v45 = vld [vmem:[#allocation2 + $0x4] sm:$0xf]
    %v46 = vld [vmem:[#allocation5] sm:$0xf]
    %v47 = vld [vmem:[#allocation5 + $0x4] sm:$0xf]
    %v48 = vld [vmem:[#allocation5 + $0x8] sm:$0xf]
    %v49 = vld [vmem:[#allocation5 + $0xc] sm:$0xf]
    %v50 = vld [vmem:[%s2] sm:$0x1]
    %v52 = vlaneseq
    %v53 = vshrl.u32 %v52, 7
    %v54 = vsub.s32 0, %v53
    %v55 = vrot.slane %v50, %v54
    %v59 = vunpack.c.l.b16 %v44
    %v60 = vunpack.c.l.b16 %v45
    %v61 = vpack.c.b16 %v60, %v59
    %v66 = vunpack.c.l.b16 %v46
    %v67 = vunpack.c.l.b16 %v47
    %v68 = vunpack.c.l.b16 %v48
    %v69 = vunpack.c.l.b16 %v49
    %v70 = vpack.c.b16 %v67, %v66
    %v71 = vpack.c.b16 %v69, %v68
    %vm74 = vcmask 261120
    %v76 = vsel %vm74, %v61, 0
    %78 = vmatprep.subr.bf16.mxu0 0
    %79 = vmatpush1.bf16.msra.mxu0 0
    %80 = vmatprep.subr.bf16.mxu0 0
    %81 = vmatpush1.bf16.msra.mxu0 0
    %82 = vmatprep.subr.bf16.mxu0 0
    %83 = vmatpush1.bf16.msra.mxu0 0
    %84 = vmatprep.subr.bf16.mxu0 0
    %85 = vmatpush1.bf16.msra.mxu0 0
    %86 = vmatprep.subr.bf16.mxu0 0
    %87 = vmatpush1.bf16.msra.mxu0 0
    %88 = vmatprep.subr.bf16.mxu0 0
    %89 = vmatpush1.bf16.msra.mxu0 0
    %90 = vmatprep.subr.bf16.mxu0 0
    %91 = vmatpush1.bf16.msra.mxu0 %v71
    %92 = vmatprep.subr.bf16.mxu0 0
    %93 = vmatpush1.bf16.msra.mxu0 %v70
    %94 = vmatprep.subr.bf16.mxu0 0
    %95 = vmatpush2.bf16.msra.mxu0 0
    %96 = vmatprep.subr.bf16.mxu0 0
    %97 = vmatpush2.bf16.msra.mxu0 0
    %98 = vmatprep.subr.bf16.mxu0 0
    %99 = vmatpush2.bf16.msra.mxu0 0
    %100 = vmatprep.subr.bf16.mxu0 0
    %101 = vmatpush2.bf16.msra.mxu0 0
    %102 = vmatprep.subr.bf16.mxu0 0
    %103 = vmatpush2.bf16.msra.mxu0 0
    %104 = vmatprep.subr.bf16.mxu0 0
    %105 = vmatpush2.bf16.msra.mxu0 0
    %106 = vmatprep.subr.bf16.mxu0 0
    %107 = vmatpush2.bf16.msra.mxu0 0
    %108 = vmatprep.subr.bf16.mxu0 0
    %109 = vmatpush2.bf16.msra.mxu0 0
    %110 = vmatprep.mubr.bf16.mxu0 0
    %111 = vmatmul.mubr.bf16.gmra.mxu0 %v76
    %v112 = vpop.f32.mrf.mxu0
    %v113 = vadd.f32 %v55, %v112
    %v114 = vpop.f32.mrf.mxu0
    %v115 = vpop.f32.mrf.mxu0
    %v116 = vadd.f32 %v55, %v115
    %v117 = vpop.f32.mrf.mxu0
    %118 = vdwg.mxu0
    %v119 = vmul.f32 %v113, 0.5
    %v120 = vmul.f32 %v116, 0.5
    %v121 = vmul.f32 %v113, 0.70710677
    %v122 = vmul.f32 %v116, 0.70710677
    %v123 = verf.f32.pop %v121
    %v124 = verf.f32.pop %v122
    %v125 = vadd.f32 %v123, 1.0
    %v126 = vadd.f32 %v124, 1.0
    %v127 = vmul.f32 %v119, %v125
    %v128 = vmul.f32 %v120, %v126
    %129 = vst [vmem:[#allocation7] sm:$0xff] %v127
    %130 = vst [vmem:[#allocation7 + $0x8] sm:$0xff] %v128
    // Predicated region
    $region22: #{tpu_custom_call.1} parent=1 // pred_check
      _
    $region23: #{tpu_custom_call.1} parent=1 // pred_check_branch
      %132 = sbr.rel (0) target = $region25
    $region24: #{tpu_custom_call.1} parent=1 // pred_region
      %s134 = ssub.s32 256, 256
      %135 = vsyncadd [#allocation4], %s134
      %s136 = sshll.u32 [#allocation7], 4
      %s137 = int_to_ptr.vmem [resolvable:$true] %s136
      %142 = dma.vmem_to_hbm [thread:$0]  %s137, 256, %s3, [#allocation4], 128, 128, 8
    $region25: #{tpu_custom_call.1} parent=1 // pred_fallthru
      _
    // Predicated region
    $region26: #{tpu_custom_call.1} parent=1 // pred_check
      _
    $region27: #{tpu_custom_call.1} parent=1 // pred_check_branch
      %144 = sbr.rel (0) target = $region29
    $region28: #{tpu_custom_call.1} parent=1 // pred_region
      %145 = dma.done [#allocation4], 256
    $region29: #{tpu_custom_call.1} parent=1 // pred_fallthru
      _
    %146 = vsyncpa [#allocation3], 1
    %147 = vsyncpa [#allocation6], 1
    %148 = vsyncpa [#allocation4], 1

</llo_original>
